<compile_context>
chip_gen: v5e
topology: v5e:2x2
jax: 0.10.0
libtpu: 0.0.40
codegen_flags: <defaults>
</compile_context>

<pallas_src>
import jax
import jax.numpy as jnp
from jax import lax
from jax.experimental import pallas as pl
from jax.experimental.pallas import tpu as pltpu


def _round_up(x, m):
    return (x + m - 1) // m * m


def _make_matmul_bias_relu_kernel(b_resident, tile_k):
    """Builds a kernel computing one (TM, TN) tile of relu(A @ B + bias).

    a_ref:    (TM, TK)          im2col slab tile
    b_ref:    (TK, TN) or (Kp, TN) reshaped conv weight (streamed or resident)
    bias_ref: (1, TN)           f32 bias tile
    o_ref:    (TM, TN)          output tile (lane-dense)
    acc_ref:  (TM, TN)          f32 VMEM accumulator, persists across K axis
    """

    def kernel(a_ref, b_ref, bias_ref, o_ref, acc_ref):
        k = pl.program_id(2)

        @pl.when(k == 0)
        def _():
            acc_ref[...] = jnp.zeros_like(acc_ref)

        if b_resident:
            # Whole (Kp, TN) weight column lives in VMEM; slice the current K
            # chunk (no HBM re-streaming of B for every M tile / K step).
            start = pl.multiple_of(k * tile_k, tile_k)
            b_tile = b_ref[pl.ds(start, tile_k), :]
        else:
            b_tile = b_ref[...]

        acc_ref[...] += jnp.dot(a_ref[...], b_tile,
                                preferred_element_type=jnp.float32)

        @pl.when(k == pl.num_programs(2) - 1)
        def _():
            y = acc_ref[...] + bias_ref[...]           # bias broadcast over rows
            o_ref[...] = jnp.maximum(y, 0.0).astype(o_ref.dtype)

    return kernel


def basic_conv2d(x_nchw, weight_oihw, bias, *, stride=1, padding=0,
                 compute_dtype=jnp.bfloat16,
                 tile_m=512, tile_n=256, tile_k=512):
    """BasicConv2d forward: Conv2d(stride, padding) + ReLU.

    x_nchw:      (N, Cin, H, W)      PyTorch NCHW input
    weight_oihw: (Cout, Cin, KH, KW) PyTorch conv weight
    bias:        (Cout,)
    returns:     (N, Cout, Ho, Wo)   NCHW

    Note: compute_dtype=bfloat16 (f32 accumulation) by default -- an inference
    precision trade-off; pass compute_dtype=jnp.float32 for full precision.
    """
    N, Cin, H, W = x_nchw.shape
    Cout, Cin_w, KH, KW = weight_oihw.shape
    assert Cin == Cin_w, (Cin, Cin_w)

    sh, sw = (stride, stride) if isinstance(stride, int) else stride
    ph, pw = (padding, padding) if isinstance(padding, int) else padding

    Ho = (H + 2 * ph - KH) // sh + 1
    Wo = (W + 2 * pw - KW) // sw + 1
    out_dtype = x_nchw.dtype

    K = KH * KW * Cin
    M = N * Ho * Wo

    cbytes = jnp.dtype(compute_dtype).itemsize
    obytes = jnp.dtype(out_dtype).itemsize

    # ---- adaptive, lane/sublane-legal tile sizes ----
    tn = min(tile_n, _round_up(Cout, 128))
    tk = min(tile_k, _round_up(K, 128))
    tm = min(tile_m, _round_up(M, 8))

    Mp = _round_up(M, tm)
    Np = _round_up(Cout, tn)
    Kp = _round_up(K, tk)

    # v7x megacore: if a small layer would give a single parallel tile, split M
    # so both TensorCores get work.
    if (Mp // tm) * (Np // tn) < 2 and tm >= 512:
        tm //= 2
        Mp = _round_up(M, tm)

    # Keep the whole weight column resident in VMEM when it is small and B
    # would otherwise be re-streamed for every M tile.
    b_resident = (Mp // tm > 1) and (2 * Kp * tn * cbytes <= 8 * 1024 * 1024)

    # ---- layout glue / im2col in plain JAX (outside the kernel) ----
    # Cast to compute dtype BEFORE expanding 9x, so the slab is written/read
    # in the narrow dtype.
    x_nhwc = jnp.transpose(x_nchw, (0, 2, 3, 1)).astype(compute_dtype)
    x_pad = jnp.pad(x_nhwc, ((0, 0), (ph, ph), (pw, pw), (0, 0)))

    taps = []
    for kh in range(KH):
        for kw in range(KW):
            taps.append(lax.slice(
                x_pad,
                (0, kh, kw, 0),
                (N, kh + (Ho - 1) * sh + 1, kw + (Wo - 1) * sw + 1, Cin),
                (1, sh, sw, 1)))                      # (N, Ho, Wo, Cin)
    if Kp > K:
        # Fuse the K-pad into the concat instead of a separate full-slab pad.
        taps.append(jnp.zeros((N, Ho, Wo, Kp - K), compute_dtype))
    cols = jnp.concatenate(taps, axis=-1).reshape(M, Kp)

    a_p = jnp.pad(cols, ((0, Mp - M), (0, 0)))        # row pad only (tiny)

    w_mat = jnp.transpose(weight_oihw.astype(compute_dtype),
                          (2, 3, 1, 0)).reshape(K, Cout)
    b_p = jnp.pad(w_mat, ((0, Kp - K), (0, Np - Cout)))
    bias_p = jnp.pad(bias.astype(jnp.float32), (0, Np - Cout)).reshape(1, Np)

    # ---- VMEM budget (double-buffered) and compiler params ----
    b_rows = Kp if b_resident else tk
    vmem_need = (2 * tm * tk * cbytes        # A double buffer
                 + 2 * b_rows * tn * cbytes  # B double buffer
                 + tm * tn * 4               # f32 accumulator
                 + 2 * tm * tn * obytes      # output double buffer
                 + 2 * tn * 4)               # bias
    vmem_limit = min(48 * 1024 * 1024,
                     max(32 * 1024 * 1024, int(vmem_need * 2)))

    grid = (Mp // tm, Np // tn, Kp // tk)

    if b_resident:
        b_spec = pl.BlockSpec((Kp, tn), lambda i, j, k: (0, j))
    else:
        b_spec = pl.BlockSpec((tk, tn), lambda i, j, k: (k, j))

    cost = pl.CostEstimate(
        flops=2 * Mp * Np * Kp,
        transcendentals=0,
        bytes_accessed=(Mp * Kp * cbytes + Kp * Np * cbytes
                        + Mp * Np * obytes + Np * 4),
    )

    kernel = _make_matmul_bias_relu_kernel(b_resident, tk)

    out2d = pl.pallas_call(
        kernel,
        out_shape=jax.ShapeDtypeStruct((Mp, Np), out_dtype),
        grid_spec=pltpu.PrefetchScalarGridSpec(
            num_scalar_prefetch=0,
            grid=grid,
            in_specs=[
                pl.BlockSpec((tm, tk), lambda i, j, k: (i, k)),
                b_spec,
                pl.BlockSpec((1, tn), lambda i, j, k: (0, j)),
            ],
            out_specs=pl.BlockSpec((tm, tn), lambda i, j, k: (i, j)),
            scratch_shapes=[pltpu.VMEM((tm, tn), jnp.float32)],
        ),
        compiler_params=pltpu.CompilerParams(
            dimension_semantics=("parallel", "parallel", "arbitrary"),
            vmem_limit_bytes=vmem_limit,
        ),
        cost_estimate=cost,
    )(a_p, b_p, bias_p)

    out = out2d[:M, :Cout].reshape(N, Ho, Wo, Cout)
    return jnp.transpose(out, (0, 3, 1, 2))           # back to NCHW


def reference_conv2d_relu(x_nchw, weight_oihw, bias, stride=1, padding=0):
    sh, sw = (stride, stride) if isinstance(stride, int) else stride
    ph, pw = (padding, padding) if isinstance(padding, int) else padding
    y = lax.conv_general_dilated(
        x_nchw, weight_oihw,
        window_strides=(sh, sw),
        padding=[(ph, ph), (pw, pw)],
        dimension_numbers=("NCHW", "OIHW", "NCHW"),
        precision=lax.Precision.HIGHEST)
    y = y + bias.reshape(1, -1, 1, 1)
    return jnp.maximum(y, 0.0)


def _run_case(key, N, Cin, H, W, Cout, KH, KW, stride, padding):
    kx, kw, kb = jax.random.split(key, 3)
    x = jax.random.normal(kx, (N, Cin, H, W), dtype=jnp.float32)
    fan_in = Cin * KH * KW
    bound = 1.0 / (fan_in ** 0.5)
    weight = jax.random.uniform(kw, (Cout, Cin, KH, KW), jnp.float32,
                                minval=-bound, maxval=bound)
    bias = jax.random.uniform(kb, (Cout,), jnp.float32,
                              minval=-bound, maxval=bound)

    ref = reference_conv2d_relu(x, weight, bias, stride=stride, padding=padding)

    # Default path: bf16 operands, f32 accumulation.
    out_bf16 = jax.block_until_ready(
        basic_conv2d(x, weight, bias, stride=stride, padding=padding))
    assert out_bf16.shape == ref.shape, (out_bf16.shape, ref.shape)
    assert jnp.allclose(out_bf16, ref, atol=3e-2, rtol=3e-2), (
        float(jnp.max(jnp.abs(out_bf16 - ref))))

    # f32 path (tight-tolerance sanity check of the same tiling/grid).
    out_f32 = jax.block_until_ready(
        basic_conv2d(x, weight, bias, stride=stride, padding=padding,
                     compute_dtype=jnp.float32))
    assert jnp.allclose(out_f32, ref, atol=2e-3, rtol=2e-3), (
        float(jnp.max(jnp.abs(out_f32 - ref))))


if __name__ == "__main__":
    key = jax.random.PRNGKey(0)
    k1, k2 = jax.random.split(key)

    # BasicConv2d(in_channels=4, out_channels=8, kernel_size=3, padding=1)
    _run_case(k1, N=2, Cin=4, H=16, W=16, Cout=8, KH=3, KW=3,
              stride=1, padding=1)

    # Strided variant (GoogLeNet-style reduction conv, small shapes).
    _run_case(k2, N=2, Cin=4, H=16, W=16, Cout=16, KH=3, KW=3,
              stride=2, padding=1)

    print("KERNEL_OK")
</pallas_src>

<mosaic_0001>
module attributes {stable_mosaic.version = 11 : i64} {
  func.func @kernel(%arg0: i32, %arg1: i32, %arg2: i32, %arg3: memref<256x128xbf16, #tpu.memory_space<vmem>>, %arg4: memref<128x128xbf16, #tpu.memory_space<vmem>>, %arg5: memref<1x128xf32, #tpu.memory_space<vmem>>, %arg6: memref<256x128xf32, #tpu.memory_space<vmem>>, %arg7: memref<256x128xf32, #tpu.memory_space<vmem>>) attributes {dimension_semantics = [#tpu.dimension_semantics<parallel>, #tpu.dimension_semantics<parallel>, #tpu.dimension_semantics<arbitrary>], iteration_bounds = array<i64: 2, 1, 1>, scalar_prefetch = 0 : i64, scratch_operands = 1 : i64, tpu.core_type = #tpu.core_type<tc>, window_params = [{transform_indices = @transform_0, window_bounds = array<i64: 256, 128>}, {transform_indices = @transform_1, window_bounds = array<i64: 128, 128>}, {transform_indices = @transform_2, window_bounds = array<i64: 1, 128>}, {transform_indices = @transform_3, window_bounds = array<i64: 256, 128>}]} {
    %c0_i32 = arith.constant 0 : i32
    %0 = arith.cmpi eq, %arg2, %c0_i32 : i32
    %1 = arith.extui %0 : i1 to i32
    %c0_i32_0 = arith.constant 0 : i32
    %2 = arith.cmpi ne, %1, %c0_i32_0 : i32
    scf.if %2 {
      %cst_9 = arith.constant 0.000000e+00 : f32
      %15 = vector.broadcast %cst_9 : f32 to vector<256x128xf32>
      %c0_10 = arith.constant 0 : index
      %c0_11 = arith.constant 0 : index
      %16 = vector.load %arg7[%c0_10, %c0_11] : memref<256x128xf32, #tpu.memory_space<vmem>>, vector<256x128xf32>
      tpu.vector_store %arg7[%c0_10, %c0_11], %15 {strides = array<i32>} : memref<256x128xf32, #tpu.memory_space<vmem>>, vector<256x128xf32>,
    } else {
    }
    %c128_i32 = arith.constant 128 : i32
    %3 = arith.muli %arg2, %c128_i32 : i32
    %4 = tpu.assume_multiple %3, 128 : i32
    %5 = arith.index_cast %4 : i32 to index
    %c0 = arith.constant 0 : index
    %6 = vector.load %arg4[%5, %c0] : memref<128x128xbf16, #tpu.memory_space<vmem>>, vector<128x128xbf16>
    %c0_1 = arith.constant 0 : index
    %c0_2 = arith.constant 0 : index
    %7 = vector.load %arg7[%c0_1, %c0_2] : memref<256x128xf32, #tpu.memory_space<vmem>>, vector<256x128xf32>
    %c0_3 = arith.constant 0 : index
    %c0_4 = arith.constant 0 : index
    %8 = vector.load %arg3[%c0_3, %c0_4] : memref<256x128xbf16, #tpu.memory_space<vmem>>, vector<256x128xbf16>
    %cst = arith.constant dense<0.000000e+00> : vector<256x128xf32>
    %9 = tpu.matmul %8, %6, %cst {dimension_numbers = #tpu.dot_dimension_numbers<[1], [0], [0], [1], [0, 0, 1, 1], [], []>} : vector<256x128xbf16>, vector<128x128xbf16>, vector<256x128xf32> -> vector<256x128xf32>
    %10 = arith.addf %7, %9 : vector<256x128xf32>
    %c0_5 = arith.constant 0 : index
    %c0_6 = arith.constant 0 : index
    %11 = vector.load %arg7[%c0_5, %c0_6] : memref<256x128xf32, #tpu.memory_space<vmem>>, vector<256x128xf32>
    tpu.vector_store %arg7[%c0_5, %c0_6], %10 {strides = array<i32>} : memref<256x128xf32, #tpu.memory_space<vmem>>, vector<256x128xf32>,
    %c0_i32_7 = arith.constant 0 : i32
    %12 = arith.cmpi eq, %arg2, %c0_i32_7 : i32
    %13 = arith.extui %12 : i1 to i32
    %c0_i32_8 = arith.constant 0 : i32
    %14 = arith.cmpi ne, %13, %c0_i32_8 : i32
    scf.if %14 {
      %c0_9 = arith.constant 0 : index
      %c0_10 = arith.constant 0 : index
      %15 = vector.load %arg7[%c0_9, %c0_10] : memref<256x128xf32, #tpu.memory_space<vmem>>, vector<256x128xf32>
      %c0_11 = arith.constant 0 : index
      %c0_12 = arith.constant 0 : index
      %16 = vector.load %arg5[%c0_11, %c0_12] : memref<1x128xf32, #tpu.memory_space<vmem>>, vector<1x128xf32>
      %17 = vector.broadcast %16 : vector<1x128xf32> to vector<256x128xf32>
      %18 = arith.addf %15, %17 : vector<256x128xf32>
      %cst_13 = arith.constant 0.000000e+00 : f32
      %19 = vector.broadcast %cst_13 : f32 to vector<256x128xf32>
      %20 = arith.maximumf %18, %19 : vector<256x128xf32>
      %c0_14 = arith.constant 0 : index
      %c0_15 = arith.constant 0 : index
      %21 = vector.load %arg6[%c0_14, %c0_15] : memref<256x128xf32, #tpu.memory_space<vmem>>, vector<256x128xf32>
      tpu.vector_store %arg6[%c0_14, %c0_15], %20 {strides = array<i32>} : memref<256x128xf32, #tpu.memory_space<vmem>>, vector<256x128xf32>,
    } else {
    }
    return
  }
  func.func @transform_0(%arg0: i32, %arg1: i32, %arg2: i32) -> (i32, i32) {
    %c0_i32 = arith.constant 0 : i32
    return %arg0, %arg2 : i32, i32
  }
  func.func @transform_1(%arg0: i32, %arg1: i32, %arg2: i32) -> (i32, i32) {
    %c0_i32 = arith.constant 0 : i32
    %c0_i32_0 = arith.constant 0 : i32
    return %c0_i32, %arg1 : i32, i32
  }
  func.func @transform_2(%arg0: i32, %arg1: i32, %arg2: i32) -> (i32, i32) {
    %c0_i32 = arith.constant 0 : i32
    %c0_i32_0 = arith.constant 0 : i32
    return %c0_i32, %arg1 : i32, i32
  }
  func.func @transform_3(%arg0: i32, %arg1: i32, %arg2: i32) -> (i32, i32) {
    %c0_i32 = arith.constant 0 : i32
    return %arg0, %arg1 : i32, i32
  }
}

</mosaic_0001>

<llo_original>
// kernel: tpu_custom_call.1
$region0: #{tpu_custom_call.1}
  #allocation0 [shape = 'u32[]', space=smem, size = 0x4, offset = 0x4, fixed_abs, tag = 'smem constant byte address 0x4 - core index']
  #allocation1 [shape = 'u32[72,128]{1,0:T(1,128)}', space=vmem, size = 0x9000, scoped, tag = 'internal scratch']
  #allocation2 [shape = 'f32[256,128]{1,0:T(8,128)}', space=vmem, size = 0x20000, scoped, tag = 'scratch operand']
  %s0 = inlined_call_operand.hbm [shape: bf16[512,128], index: 0, kind: input, shape index: {}]
  %s1 = inlined_call_operand.hbm [shape: bf16[128,128], index: 1, kind: input, shape index: {}]
  %s2 = inlined_call_operand.vmem [shape: f32[1,128], index: 2, kind: input, shape index: {}]
  %s3 = inlined_call_operand.hbm [shape: f32[512,128], index: 3, kind: output, shape index: {}]
  %s4 = sld [smem:[#allocation0]]
  $region61: #{tpu_custom_call.1} parent=0
    _
  %s6 = ssub.s32 1, %s4
  %s7 = scalar_select 0, %s6, %s4
  $region1: #{tpu_custom_call.1} parent=0
    #allocation3 [shape = 'u8[131072]{0}', space=vmem, size = 0x20000, scoped, tag = 'input window, operand 0']
    #allocation4 [shape = 's32[2]{0}', space=sflag, size = 0x8, scoped, tag = 'scoped memory for tpu_custom_call.1']
    #allocation5 [shape = 's32[2]{0}', space=sflag, size = 0x8, scoped, tag = 'scoped memory for tpu_custom_call.1']
    #allocation6 [shape = 'u8[32768]{0}', space=vmem, size = 0x8000, scoped, tag = 'input window, operand 1, single buffered']
    #allocation7 [shape = 's32[1]{0}', space=sflag, size = 0x4, scoped, tag = 'scoped memory for tpu_custom_call.1']
    #allocation8 [shape = 'u8[262144]{0}', space=vmem, size = 0x40000, scoped, tag = 'output window, operand 0']
    %8 = vsyncpa [#allocation4], 0
    %s9 = scalar_lea.sflag [#allocation4], 1
    %10 = vsyncpa %s9, 0
    %11 = vsyncpa [#allocation7], 0
    %12 = vsyncpa [#allocation5], 0
    %s13 = scalar_lea.sflag [#allocation5], 1
    %14 = vsyncpa %s13, 0
    loop: start=0, step=1, limit=4
    $region2: #{tpu_custom_call.1} parent=1 // loop_pre_header
      _
    $region3: #{tpu_custom_call.1} parent=1 // loop_header
      %s16 = sphi 0, %s20
      %p17 = scmp.ge.s32.totalorder %s16, 4
      %s23 = sphi 0, %s42
      %s24 = sphi 0, %s38
      %s25 = sphi 0, %s34
      %s26 = sphi 0, %s23
      %s27 = sphi 0, %s24
      %s28 = sphi 0, %s25
      %s29 = sphi 0, %s26
      %s30 = sphi 0, %s27
      %s31 = sphi 0, %s28
      %s47 = sphi 0, %s49
      %s50 = sphi 0, %s47
      %s51 = sphi 0, %s50
      %s67 = sphi 0, %s51
      %s73 = sphi 0, %s75
      %s76 = sphi 0, %s73
      %s77 = sphi 0, %s76
      %s93 = sphi 0, %s77
      %s99 = sphi 0, %s101
      %s102 = sphi 0, %s99
      %s103 = sphi 0, %s102
      %s119 = sphi 0, %s103
      %s127 = sphi 0, %s129
      %s130 = sphi 0, %s127
      %s131 = sphi 0, %s130
      %s147 = sphi 0, %s131
    $region4: #{tpu_custom_call.1} parent=1 // loop_header_branch
      %19 = sbr.rel (%p17) target = $region8
    $region5: #{tpu_custom_call.1} parent=1 // loop_body
      %s21 = ssub.s32 %s16, 1
      %s22 = ssub.s32 %s16, 2
      %s32 = sadd.s32 1, %s25
      %p33 = scmp.ge.s32.totalorder %s32, 1
      %s34 = scalar_select %p33, 0, %s32
      %s35 = sadd.s32 1, %s24
      %s36 = scalar_select %p33, %s35, %s24
      %p37 = scmp.ge.s32.totalorder %s36, 1
      %s38 = scalar_select %p37, 0, %s36
      %s39 = sadd.s32 1, %s23
      %s40 = scalar_select %p37, %s39, %s23
      %p41 = scmp.ge.s32.totalorder %s40, 2
      %s42 = scalar_select %p41, 0, %s40
      %s43 = ssub.s32 %s23, %s42
      %s44 = ssub.s32 %s25, %s34
      %s45 = sor.u32 %s43, %s44
      %p46 = scmp.eq.s32.totalorder %s45, 0
      %s48 = sadd.s32 %s47, 1
      %s49 = scalar_select %p46, %s47, %s48
      %p52 = pneg %p46
      %p53 = scmp.eq.s32.totalorder %s16, 1
      %p54 = por %p52, %p53
      %p55 = scmp.ne.s32.totalorder %s47, %s50
      %p56 = scmp.eq.s32.totalorder %s16, 0
      %p57 = por %p55, %p56
      %p58 = scmp.ne.s32.totalorder %s47, %s50
      %p59 = scmp.eq.s32.totalorder %s21, 1
      %p60 = por %p58, %p59
      %p61 = scmp.ne.s32.totalorder %s50, %s51
      %p62 = scmp.eq.s32.totalorder %s21, 0
      %p63 = por %p61, %p62
      %p64 = scmp.ne.s32.totalorder %s50, %s51
      %p65 = scmp.eq.s32.totalorder %s22, 1
      %p66 = por %p64, %p65
      %p68 = scmp.ne.s32.totalorder %s51, %s67
      %p69 = scmp.eq.s32.totalorder %s22, 0
      %p70 = por %p68, %p69
      %s71 = ssub.s32 %s24, %s38
      %p72 = scmp.eq.s32.totalorder %s71, 0
      %s74 = sadd.s32 %s73, 1
      %s75 = scalar_select %p72, %s73, %s74
      %p78 = pneg %p72
      %p79 = scmp.eq.s32.totalorder %s16, 1
      %p80 = por %p78, %p79
      %p81 = scmp.ne.s32.totalorder %s73, %s76
      %p82 = scmp.eq.s32.totalorder %s16, 0
      %p83 = por %p81, %p82
      %p84 = scmp.ne.s32.totalorder %s73, %s76
      %p85 = scmp.eq.s32.totalorder %s21, 1
      %p86 = por %p84, %p85
      %p87 = scmp.ne.s32.totalorder %s76, %s77
      %p88 = scmp.eq.s32.totalorder %s21, 0
      %p89 = por %p87, %p88
      %p90 = scmp.ne.s32.totalorder %s76, %s77
      %p91 = scmp.eq.s32.totalorder %s22, 1
      %p92 = por %p90, %p91
      %p94 = scmp.ne.s32.totalorder %s77, %s93
      %p95 = scmp.eq.s32.totalorder %s22, 0
      %p96 = por %p94, %p95
      %s97 = ssub.s32 %s24, %s38
      %p98 = scmp.eq.s32.totalorder %s97, 0
      %s100 = sadd.s32 %s99, 1
      %s101 = scalar_select %p98, %s99, %s100
      %p104 = pneg %p98
      %p105 = scmp.eq.s32.totalorder %s16, 1
      %p106 = por %p104, %p105
      %p107 = scmp.ne.s32.totalorder %s99, %s102
      %p108 = scmp.eq.s32.totalorder %s16, 0
      %p109 = por %p107, %p108
      %p110 = scmp.ne.s32.totalorder %s99, %s102
      %p111 = scmp.eq.s32.totalorder %s21, 1
      %p112 = por %p110, %p111
      %p113 = scmp.ne.s32.totalorder %s102, %s103
      %p114 = scmp.eq.s32.totalorder %s21, 0
      %p115 = por %p113, %p114
      %p116 = scmp.ne.s32.totalorder %s102, %s103
      %p117 = scmp.eq.s32.totalorder %s22, 1
      %p118 = por %p116, %p117
      %p120 = scmp.ne.s32.totalorder %s103, %s119
      %p121 = scmp.eq.s32.totalorder %s22, 0
      %p122 = por %p120, %p121
      %s123 = ssub.s32 %s23, %s42
      %s124 = ssub.s32 %s24, %s38
      %s125 = sor.u32 %s123, %s124
      %p126 = scmp.eq.s32.totalorder %s125, 0
      %s128 = sadd.s32 %s127, 1
      %s129 = scalar_select %p126, %s127, %s128
      %p132 = pneg %p126
      %p133 = scmp.eq.s32.totalorder %s16, 1
      %p134 = por %p132, %p133
      %p135 = scmp.ne.s32.totalorder %s127, %s130
      %p136 = scmp.eq.s32.totalorder %s16, 0
      %p137 = por %p135, %p136
      %p138 = scmp.ne.s32.totalorder %s127, %s130
      %p139 = scmp.eq.s32.totalorder %s21, 1
      %p140 = por %p138, %p139
      %p141 = scmp.ne.s32.totalorder %s130, %s131
      %p142 = scmp.eq.s32.totalorder %s21, 0
      %p143 = por %p141, %p142
      %p144 = scmp.ne.s32.totalorder %s130, %s131
      %p145 = scmp.eq.s32.totalorder %s22, 1
      %p146 = por %p144, %p145
      %p148 = scmp.ne.s32.totalorder %s131, %s147
      %p149 = scmp.eq.s32.totalorder %s22, 0
      %p150 = por %p148, %p149
      %p151 = scmp.le.s32.totalorder 1, %s16
      %p152 = scmp.lt.s32.totalorder %s16, 3
      %p153 = pnand %p151, %p152
      %p154 = pneg %p153
      // Predicated region
      $region9: #{tpu_custom_call.1} parent=5 // pred_check
        _
      $region10: #{tpu_custom_call.1} parent=5 // pred_check_branch
        %156 = sbr.rel (%p153) target = $region12
      $region11: #{tpu_custom_call.1} parent=5 // pred_region
        %s157 = ssub.s32 %s16, 1
        // Predicated region
        $region13: #{tpu_custom_call.1} parent=11 // pred_check
          %p158 = pneg %p89
        $region14: #{tpu_custom_call.1} parent=11 // pred_check_branch
          %160 = sbr.rel (%p158) target = $region16
        $region15: #{tpu_custom_call.1} parent=11 // pred_region
          %162 = vsyncadd [#allocation7], 0
          %s163 = smul.addr %s27, 4
          %s164 = scalar_lea.hbm %s1, %s163
          %s165 = sshll.u32 %s164, 4
          %s166 = int_to_ptr.hbm [resolvable:$true] %s165
          %s167 = sshll.u32 [#allocation6], 4
          %s168 = int_to_ptr.vmem [resolvable:$true] %s167
          %173 = dma.hbm_to_vmem [thread:$0]  %s166, 1024, %s168, [#allocation7], 64, 64, 4
        $region16: #{tpu_custom_call.1} parent=11 // pred_fallthru
          _
        // Predicated region
        $region17: #{tpu_custom_call.1} parent=11 // pred_check
          %p174 = pneg %p115
        $region18: #{tpu_custom_call.1} parent=11 // pred_check_branch
          %176 = sbr.rel (%p174) target = $region20
        $region19: #{tpu_custom_call.1} parent=11 // pred_region
          %p177 = scmp.lt.s32.totalorder %s27, 0
          %s178 = scalar_select %p177, %s27, 0
          %s179 = scalar_lea.vmem %s2, %s178
        $region20: #{tpu_custom_call.1} parent=11 // pred_fallthru
          _
      $region12: #{tpu_custom_call.1} parent=5 // pred_fallthru
        _
      %p180 = scmp.lt.s32.totalorder %s16, 2
      // Predicated region
      $region21: #{tpu_custom_call.1} parent=5 // pred_check
        %p181 = pneg %p180
      $region22: #{tpu_custom_call.1} parent=5 // pred_check_branch
        %183 = sbr.rel (%p181) target = $region24
      $region23: #{tpu_custom_call.1} parent=5 // pred_region
        // Predicated region
        $region25: #{tpu_custom_call.1} parent=23 // pred_check
          %p184 = pneg %p57
        $region26: #{tpu_custom_call.1} parent=23 // pred_check_branch
          %186 = sbr.rel (%p184) target = $region28
        $region27: #{tpu_custom_call.1} parent=23 // pred_region
          %s187 = sand.u32 %s47, 1
          %s188 = scalar_lea.sflag [#allocation4], %s187
          %s189 = sand.u32 %s47, 1
          %s190 = smul.addr %s189, 128
          %s191 = scalar_lea.vmem [#allocation3], %s190
          %s192 = smul.u32 32, %s23
          %194 = vsyncadd %s188, 0
          %s195 = sadd.s32 %s25, %s192
          %s196 = smul.addr %s195, 4
          %s197 = scalar_lea.hbm %s0, %s196
          %s198 = sshll.u32 %s197, 4
          %s199 = int_to_ptr.hbm [resolvable:$true] %s198
          %s200 = sshll.u32 %s191, 4
          %s201 = int_to_ptr.vmem [resolvable:$true] %s200
          %206 = dma.hbm_to_vmem [thread:$0]  %s199, 2048, %s201, %s188, 64, 64, 4
        $region28: #{tpu_custom_call.1} parent=23 // pred_fallthru
          _
      $region24: #{tpu_custom_call.1} parent=5 // pred_fallthru
        _
      %p207 = scmp.le.s32.totalorder 1, %s16
      %p208 = scmp.lt.s32.totalorder %s16, 3
      %p209 = pnand %p207, %p208
      %p210 = pneg %p209
      // Predicated region
      $region29: #{tpu_custom_call.1} parent=5 // pred_check
        _
      $region30: #{tpu_custom_call.1} parent=5 // pred_check_branch
        %212 = sbr.rel (%p209) target = $region32
      $region31: #{tpu_custom_call.1} parent=5 // pred_region
        %s213 = ssub.s32 %s16, 1
        %s214 = sand.u32 %s50, 1
        %s215 = scalar_lea.sflag [#allocation4], %s214
        %s216 = sand.u32 %s50, 1
        %s217 = smul.addr %s216, 128
        %s218 = scalar_lea.vmem [#allocation3], %s217
        // Predicated region
        $region33: #{tpu_custom_call.1} parent=31 // pred_check
          %p219 = pneg %p63
        $region34: #{tpu_custom_call.1} parent=31 // pred_check_branch
          %221 = sbr.rel (%p219) target = $region36
        $region35: #{tpu_custom_call.1} parent=31 // pred_region
          %223 = dma.done %s215, 2048
        $region36: #{tpu_custom_call.1} parent=31 // pred_fallthru
          _
        // Predicated region
        $region37: #{tpu_custom_call.1} parent=31 // pred_check
          %p224 = pneg %p89
        $region38: #{tpu_custom_call.1} parent=31 // pred_check_branch
          %226 = sbr.rel (%p224) target = $region40
        $region39: #{tpu_custom_call.1} parent=31 // pred_region
          %228 = dma.done [#allocation7], 1024
        $region40: #{tpu_custom_call.1} parent=31 // pred_fallthru
          _
        %s229 = sand.u32 %s50, 1
        %s230 = scalar_lea.sflag [#allocation4], %s229
        %s231 = sand.u32 %s50, 1
        %s232 = smul.addr %s231, 128
        %s233 = scalar_lea.vmem [#allocation3], %s232
        %p234 = pneg %p63
        %p235 = pneg %p60
        %p236 = pneg %p89
        %p237 = pneg %p86
        %p238 = scmp.lt.s32.totalorder %s27, 0
        %s239 = scalar_select %p238, %s27, 0
        %s240 = scalar_lea.vmem %s2, %s239
        %p241 = pneg %p115
        %p242 = pneg %p112
        %p243 = pneg %p143
        %p244 = pneg %p140
        %s245 = sand.u32 %s130, 1
        %s246 = scalar_lea.sflag [#allocation5], %s245
        %s247 = sand.u32 %s130, 1
        %s248 = smul.addr %s247, 256
        %s249 = scalar_lea.vmem [#allocation8], %s248
        %s250 = smul.u32 32, %s26
        %p251 = scmp.lt.s32.totalorder %s27, 0
        %s252 = scalar_select %p251, %s27, 0
        %s253 = scalar_lea.vmem %s2, %s252
        %s254 = smul.u32 32, %s26
        %p255 = scmp.eq.s32.totalorder %s28, 0
        // Predicated region
        $region41: #{tpu_custom_call.1} parent=31 // pred_check
          %p256 = pneg %p255
        $region42: #{tpu_custom_call.1} parent=31 // pred_check_branch
          %258 = sbr.rel (%p256) target = $region44
        $region43: #{tpu_custom_call.1} parent=31 // pred_region
          %259 = vst [vmem:[#allocation2] sm:$0xff] 0.0
          %260 = vst [vmem:[#allocation2 + $0x8] sm:$0xff] 0.0
          %261 = vst [vmem:[#allocation2 + $0x10] sm:$0xff] 0.0
          %262 = vst [vmem:[#allocation2 + $0x18] sm:$0xff] 0.0
          %263 = vst [vmem:[#allocation2 + $0x20] sm:$0xff] 0.0
          %264 = vst [vmem:[#allocation2 + $0x28] sm:$0xff] 0.0
          %265 = vst [vmem:[#allocation2 + $0x30] sm:$0xff] 0.0
          %266 = vst [vmem:[#allocation2 + $0x38] sm:$0xff] 0.0
          %267 = vst [vmem:[#allocation2 + $0x40] sm:$0xff] 0.0
          %268 = vst [vmem:[#allocation2 + $0x48] sm:$0xff] 0.0
          %269 = vst [vmem:[#allocation2 + $0x50] sm:$0xff] 0.0
          %270 = vst [vmem:[#allocation2 + $0x58] sm:$0xff] 0.0
          %271 = vst [vmem:[#allocation2 + $0x60] sm:$0xff] 0.0
          %272 = vst [vmem:[#allocation2 + $0x68] sm:$0xff] 0.0
          %273 = vst [vmem:[#allocation2 + $0x70] sm:$0xff] 0.0
          %274 = vst [vmem:[#allocation2 + $0x78] sm:$0xff] 0.0
          %275 = vst [vmem:[#allocation2 + $0x80] sm:$0xff] 0.0
          %276 = vst [vmem:[#allocation2 + $0x88] sm:$0xff] 0.0
          %277 = vst [vmem:[#allocation2 + $0x90] sm:$0xff] 0.0
          %278 = vst [vmem:[#allocation2 + $0x98] sm:$0xff] 0.0
          %279 = vst [vmem:[#allocation2 + $0xa0] sm:$0xff] 0.0
          %280 = vst [vmem:[#allocation2 + $0xa8] sm:$0xff] 0.0
          %281 = vst [vmem:[#allocation2 + $0xb0] sm:$0xff] 0.0
          %282 = vst [vmem:[#allocation2 + $0xb8] sm:$0xff] 0.0
          %283 = vst [vmem:[#allocation2 + $0xc0] sm:$0xff] 0.0
          %284 = vst [vmem:[#allocation2 + $0xc8] sm:$0xff] 0.0
          %285 = vst [vmem:[#allocation2 + $0xd0] sm:$0xff] 0.0
          %286 = vst [vmem:[#allocation2 + $0xd8] sm:$0xff] 0.0
          %287 = vst [vmem:[#allocation2 + $0xe0] sm:$0xff] 0.0
          %288 = vst [vmem:[#allocation2 + $0xe8] sm:$0xff] 0.0
          %289 = vst [vmem:[#allocation2 + $0xf0] sm:$0xff] 0.0
          %290 = vst [vmem:[#allocation2 + $0xf8] sm:$0xff] 0.0
        $region44: #{tpu_custom_call.1} parent=31 // pred_fallthru
          _
        %s291 = smul.u32 %s28, 128
        %s292 = sshra.s32 %s291, 3
        %s293 = sand.u32 %s291, 7
        %s294 = smul.addr %s292, 4
        %s295 = scalar_lea.vmem [#allocation6], %s294
        %v296 = vld [vmem:[%s295] sm:$0xf]
        %v297 = vld [vmem:[%s295 + $0x4] sm:$0xf]
        %v298 = vld [vmem:[%s295 + $0x8] sm:$0xf]
        %v299 = vld [vmem:[%s295 + $0xc] sm:$0xf]
        %v300 = vld [vmem:[%s295 + $0x10] sm:$0xf]
        %v301 = vld [vmem:[%s295 + $0x14] sm:$0xf]
        %v302 = vld [vmem:[%s295 + $0x18] sm:$0xf]
        %v303 = vld [vmem:[%s295 + $0x1c] sm:$0xf]
        %v304 = vld [vmem:[%s295 + $0x20] sm:$0xf]
        %v305 = vld [vmem:[%s295 + $0x24] sm:$0xf]
        %v306 = vld [vmem:[%s295 + $0x28] sm:$0xf]
        %v307 = vld [vmem:[%s295 + $0x2c] sm:$0xf]
        %v308 = vld [vmem:[%s295 + $0x30] sm:$0xf]
        %v309 = vld [vmem:[%s295 + $0x34] sm:$0xf]
        %v310 = vld [vmem:[%s295 + $0x38] sm:$0xf]
        %v311 = vld [vmem:[%s295 + $0x3c] sm:$0xf]
        %v312 = vld [vmem:[#allocation2] sm:$0xff]
        %v313 = vld [vmem:[#allocation2 + $0x8] sm:$0xff]
        %v314 = vld [vmem:[#allocation2 + $0x10] sm:$0xff]
        %v315 = vld [vmem:[#allocation2 + $0x18] sm:$0xff]
        %v316 = vld [vmem:[#allocation2 + $0x20] sm:$0xff]
        %v317 = vld [vmem:[#allocation2 + $0x28] sm:$0xff]
        %v318 = vld [vmem:[#allocation2 + $0x30] sm:$0xff]
        %v319 = vld [vmem:[#allocation2 + $0x38] sm:$0xff]
        %v320 = vld [vmem:[#allocation2 + $0x40] sm:$0xff]
        %v321 = vld [vmem:[#allocation2 + $0x48] sm:$0xff]
        %v322 = vld [vmem:[#allocation2 + $0x50] sm:$0xff]
        %v323 = vld [vmem:[#allocation2 + $0x58] sm:$0xff]
        %v324 = vld [vmem:[#allocation2 + $0x60] sm:$0xff]
        %v325 = vld [vmem:[#allocation2 + $0x68] sm:$0xff]
        %v326 = vld [vmem:[#allocation2 + $0x70] sm:$0xff]
        %v327 = vld [vmem:[#allocation2 + $0x78] sm:$0xff]
        %v328 = vld [vmem:[#allocation2 + $0x80] sm:$0xff]
        %v329 = vld [vmem:[#allocation2 + $0x88] sm:$0xff]
        %v330 = vld [vmem:[#allocation2 + $0x90] sm:$0xff]
        %v331 = vld [vmem:[#allocation2 + $0x98] sm:$0xff]
        %v332 = vld [vmem:[#allocation2 + $0xa0] sm:$0xff]
        %v333 = vld [vmem:[#allocation2 + $0xa8] sm:$0xff]
        %v334 = vld [vmem:[#allocation2 + $0xb0] sm:$0xff]
        %v335 = vld [vmem:[#allocation2 + $0xb8] sm:$0xff]
        %v336 = vld [vmem:[#allocation2 + $0xc0] sm:$0xff]
        %v337 = vld [vmem:[#allocation2 + $0xc8] sm:$0xff]
        %v338 = vld [vmem:[#allocation2 + $0xd0] sm:$0xff]
        %v339 = vld [vmem:[#allocation2 + $0xd8] sm:$0xff]
        %v340 = vld [vmem:[#allocation2 + $0xe0] sm:$0xff]
        %v341 = vld [vmem:[#allocation2 + $0xe8] sm:$0xff]
        %v342 = vld [vmem:[#allocation2 + $0xf0] sm:$0xff]
        %v343 = vld [vmem:[#allocation2 + $0xf8] sm:$0xff]
        %v344 = vld [vmem:[%s218] sm:$0xf]
        %v345 = vld [vmem:[%s218 + $0x4] sm:$0xf]
        %v346 = vld [vmem:[%s218 + $0x8] sm:$0xf]
        %v347 = vld [vmem:[%s218 + $0xc] sm:$0xf]
        %v348 = vld [vmem:[%s218 + $0x10] sm:$0xf]
        %v349 = vld [vmem:[%s218 + $0x14] sm:$0xf]
        %v350 = vld [vmem:[%s218 + $0x18] sm:$0xf]
        %v351 = vld [vmem:[%s218 + $0x1c] sm:$0xf]
        %v352 = vld [vmem:[%s218 + $0x20] sm:$0xf]
        %v353 = vld [vmem:[%s218 + $0x24] sm:$0xf]
        %v354 = vld [vmem:[%s218 + $0x28] sm:$0xf]
        %v355 = vld [vmem:[%s218 + $0x2c] sm:$0xf]
        %v356 = vld [vmem:[%s218 + $0x30] sm:$0xf]
        %v357 = vld [vmem:[%s218 + $0x34] sm:$0xf]
        %v358 = vld [vmem:[%s218 + $0x38] sm:$0xf]
        %v359 = vld [vmem:[%s218 + $0x3c] sm:$0xf]
        %v360 = vld [vmem:[%s218 + $0x40] sm:$0xf]
        %v361 = vld [vmem:[%s218 + $0x44] sm:$0xf]
        %v362 = vld [vmem:[%s218 + $0x48] sm:$0xf]
        %v363 = vld [vmem:[%s218 + $0x4c] sm:$0xf]
        %v364 = vld [vmem:[%s218 + $0x50] sm:$0xf]
        %v365 = vld [vmem:[%s218 + $0x54] sm:$0xf]
        %v366 = vld [vmem:[%s218 + $0x58] sm:$0xf]
        %v367 = vld [vmem:[%s218 + $0x5c] sm:$0xf]
        %v368 = vld [vmem:[%s218 + $0x60] sm:$0xf]
        %v369 = vld [vmem:[%s218 + $0x64] sm:$0xf]
        %v370 = vld [vmem:[%s218 + $0x68] sm:$0xf]
        %v371 = vld [vmem:[%s218 + $0x6c] sm:$0xf]
        %v372 = vld [vmem:[%s218 + $0x70] sm:$0xf]
        %v373 = vld [vmem:[%s218 + $0x74] sm:$0xf]
        %v374 = vld [vmem:[%s218 + $0x78] sm:$0xf]
        %v375 = vld [vmem:[%s218 + $0x7c] sm:$0xf]
        %v408 = vunpack.c.l.b16 %v344
        %v409 = vunpack.c.l.b16 %v345
        %v410 = vunpack.c.l.b16 %v346
        %v411 = vunpack.c.l.b16 %v347
        %v412 = vunpack.c.l.b16 %v348
        %v413 = vunpack.c.l.b16 %v349
        %v414 = vunpack.c.l.b16 %v350
        %v415 = vunpack.c.l.b16 %v351
        %v416 = vunpack.c.l.b16 %v352
        %v417 = vunpack.c.l.b16 %v353
        %v418 = vunpack.c.l.b16 %v354
        %v419 = vunpack.c.l.b16 %v355
        %v420 = vunpack.c.l.b16 %v356
        %v421 = vunpack.c.l.b16 %v357
        %v422 = vunpack.c.l.b16 %v358
        %v423 = vunpack.c.l.b16 %v359
        %v424 = vunpack.c.l.b16 %v360
        %v425 = vunpack.c.l.b16 %v361
        %v426 = vunpack.c.l.b16 %v362
        %v427 = vunpack.c.l.b16 %v363
        %v428 = vunpack.c.l.b16 %v364
        %v429 = vunpack.c.l.b16 %v365
        %v430 = vunpack.c.l.b16 %v366
        %v431 = vunpack.c.l.b16 %v367
        %v432 = vunpack.c.l.b16 %v368
        %v433 = vunpack.c.l.b16 %v369
        %v434 = vunpack.c.l.b16 %v370
        %v435 = vunpack.c.l.b16 %v371
        %v436 = vunpack.c.l.b16 %v372
        %v437 = vunpack.c.l.b16 %v373
        %v438 = vunpack.c.l.b16 %v374
        %v439 = vunpack.c.l.b16 %v375
        %v440 = vpack.c.b16 %v409, %v408
        %v441 = vpack.c.b16 %v411, %v410
        %v442 = vpack.c.b16 %v413, %v412
        %v443 = vpack.c.b16 %v415, %v414
        %v444 = vpack.c.b16 %v417, %v416
        %v445 = vpack.c.b16 %v419, %v418
        %v446 = vpack.c.b16 %v421, %v420
        %v447 = vpack.c.b16 %v423, %v422
        %v448 = vpack.c.b16 %v425, %v424
        %v449 = vpack.c.b16 %v427, %v426
        %v450 = vpack.c.b16 %v429, %v428
        %v451 = vpack.c.b16 %v431, %v430
        %v452 = vpack.c.b16 %v433, %v432
        %v453 = vpack.c.b16 %v435, %v434
        %v454 = vpack.c.b16 %v437, %v436
        %v455 = vpack.c.b16 %v439, %v438
        %v488 = vunpack.c.l.b16 %v296
        %v489 = vunpack.c.l.b16 %v297
        %v490 = vunpack.c.l.b16 %v298
        %v491 = vunpack.c.l.b16 %v299
        %v492 = vunpack.c.l.b16 %v300
        %v493 = vunpack.c.l.b16 %v301
        %v494 = vunpack.c.l.b16 %v302
        %v495 = vunpack.c.l.b16 %v303
        %v496 = vunpack.c.l.b16 %v304
        %v497 = vunpack.c.l.b16 %v305
        %v498 = vunpack.c.l.b16 %v306
        %v499 = vunpack.c.l.b16 %v307
        %v500 = vunpack.c.l.b16 %v308
        %v501 = vunpack.c.l.b16 %v309
        %v502 = vunpack.c.l.b16 %v310
        %v503 = vunpack.c.l.b16 %v311
        %v504 = vpack.c.b16 %v489, %v488
        %v505 = vpack.c.b16 %v491, %v490
        %v506 = vpack.c.b16 %v493, %v492
        %v507 = vpack.c.b16 %v495, %v494
        %v508 = vpack.c.b16 %v497, %v496
        %v509 = vpack.c.b16 %v499, %v498
        %v510 = vpack.c.b16 %v501, %v500
        %v511 = vpack.c.b16 %v503, %v502
        %520 = vmatpush.bf16.msra.mxu0 %v511
        %521 = vmatpush.bf16.msra.mxu0 %v510
        %522 = vmatpush.bf16.msra.mxu0 %v509
        %523 = vmatpush.bf16.msra.mxu0 %v508
        %524 = vmatpush.bf16.msra.mxu0 %v507
        %525 = vmatpush.bf16.msra.mxu0 %v506
        %526 = vmatpush.bf16.msra.mxu0 %v505
        %527 = vmatpush.bf16.msra.mxu0 %v504
        %528 = vmatmul.bf16.gmra.mxu0 %v440
        %v529 = vpop.f32.mrf.mxu0
        %v530 = vadd.f32 0.0, %v529
        %v531 = vpop.f32.mrf.mxu0
        %v532 = vadd.f32 0.0, %v531
        %533 = vmatmul.bf16.gmra.mxu0 %v441
        %v534 = vpop.f32.mrf.mxu0
        %v535 = vadd.f32 0.0, %v534
        %v536 = vpop.f32.mrf.mxu0
        %v537 = vadd.f32 0.0, %v536
        %538 = vmatmul.bf16.gmra.mxu0 %v442
        %v539 = vpop.f32.mrf.mxu0
        %v540 = vadd.f32 0.0, %v539
        %v541 = vpop.f32.mrf.mxu0
        %v542 = vadd.f32 0.0, %v541
        %543 = vmatmul.bf16.gmra.mxu0 %v443
        %v544 = vpop.f32.mrf.mxu0
        %v545 = vadd.f32 0.0, %v544
        %v546 = vpop.f32.mrf.mxu0
        %v547 = vadd.f32 0.0, %v546
        %548 = vmatmul.bf16.gmra.mxu0 %v444
        %v549 = vpop.f32.mrf.mxu0
        %v550 = vadd.f32 0.0, %v549
        %v551 = vpop.f32.mrf.mxu0
        %v552 = vadd.f32 0.0, %v551
        %553 = vmatmul.bf16.gmra.mxu0 %v445
        %v554 = vpop.f32.mrf.mxu0
        %v555 = vadd.f32 0.0, %v554
        %v556 = vpop.f32.mrf.mxu0
        %v557 = vadd.f32 0.0, %v556
        %558 = vmatmul.bf16.gmra.mxu0 %v446
        %v559 = vpop.f32.mrf.mxu0
        %v560 = vadd.f32 0.0, %v559
        %v561 = vpop.f32.mrf.mxu0
        %v562 = vadd.f32 0.0, %v561
        %563 = vmatmul.bf16.gmra.mxu0 %v447
        %v564 = vpop.f32.mrf.mxu0
        %v565 = vadd.f32 0.0, %v564
        %v566 = vpop.f32.mrf.mxu0
        %v567 = vadd.f32 0.0, %v566
        %568 = vmatmul.bf16.gmra.mxu0 %v448
        %v569 = vpop.f32.mrf.mxu0
        %v570 = vadd.f32 0.0, %v569
        %v571 = vpop.f32.mrf.mxu0
        %v572 = vadd.f32 0.0, %v571
        %573 = vmatmul.bf16.gmra.mxu0 %v449
        %v574 = vpop.f32.mrf.mxu0
        %v575 = vadd.f32 0.0, %v574
        %v576 = vpop.f32.mrf.mxu0
        %v577 = vadd.f32 0.0, %v576
        %578 = vmatmul.bf16.gmra.mxu0 %v450
        %v579 = vpop.f32.mrf.mxu0
        %v580 = vadd.f32 0.0, %v579
        %v581 = vpop.f32.mrf.mxu0
        %v582 = vadd.f32 0.0, %v581
        %583 = vmatmul.bf16.gmra.mxu0 %v451
        %v584 = vpop.f32.mrf.mxu0
        %v585 = vadd.f32 0.0, %v584
        %v586 = vpop.f32.mrf.mxu0
        %v587 = vadd.f32 0.0, %v586
        %588 = vmatmul.bf16.gmra.mxu0 %v452
        %v589 = vpop.f32.mrf.mxu0
        %v590 = vadd.f32 0.0, %v589
        %v591 = vpop.f32.mrf.mxu0
        %v592 = vadd.f32 0.0, %v591
        %593 = vmatmul.bf16.gmra.mxu0 %v453
        %v594 = vpop.f32.mrf.mxu0
        %v595 = vadd.f32 0.0, %v594
        %v596 = vpop.f32.mrf.mxu0
        %v597 = vadd.f32 0.0, %v596
        %598 = vmatmul.bf16.gmra.mxu0 %v454
        %v599 = vpop.f32.mrf.mxu0
        %v600 = vadd.f32 0.0, %v599
        %v601 = vpop.f32.mrf.mxu0
        %v602 = vadd.f32 0.0, %v601
        %603 = vmatmul.bf16.gmra.mxu0 %v455
        %v604 = vpop.f32.mrf.mxu0
        %v605 = vadd.f32 0.0, %v604
        %v606 = vpop.f32.mrf.mxu0
        %v607 = vadd.f32 0.0, %v606
        %608 = vdwg.mxu0
        %v609 = vadd.f32 %v312, %v530
        %v610 = vadd.f32 %v313, %v532
        %v611 = vadd.f32 %v314, %v535
        %v612 = vadd.f32 %v315, %v537
        %v613 = vadd.f32 %v316, %v540
        %v614 = vadd.f32 %v317, %v542
        %v615 = vadd.f32 %v318, %v545
        %v616 = vadd.f32 %v319, %v547
        %v617 = vadd.f32 %v320, %v550
        %v618 = vadd.f32 %v321, %v552
        %v619 = vadd.f32 %v322, %v555
        %v620 = vadd.f32 %v323, %v557
        %v621 = vadd.f32 %v324, %v560
        %v622 = vadd.f32 %v325, %v562
        %v623 = vadd.f32 %v326, %v565
        %v624 = vadd.f32 %v327, %v567
        %v625 = vadd.f32 %v328, %v570
        %v626 = vadd.f32 %v329, %v572
        %v627 = vadd.f32 %v330, %v575
        %v628 = vadd.f32 %v331, %v577
        %v629 = vadd.f32 %v332, %v580
        %v630 = vadd.f32 %v333, %v582
        %v631 = vadd.f32 %v334, %v585
        %v632 = vadd.f32 %v335, %v587
        %v633 = vadd.f32 %v336, %v590
        %v634 = vadd.f32 %v337, %v592
        %v635 = vadd.f32 %v338, %v595
        %v636 = vadd.f32 %v339, %v597
        %v637 = vadd.f32 %v340, %v600
        %v638 = vadd.f32 %v341, %v602
        %v639 = vadd.f32 %v342, %v605
        %v640 = vadd.f32 %v343, %v607
        %641 = vst [vmem:[#allocation2] sm:$0xff] %v609
        %642 = vst [vmem:[#allocation2 + $0x8] sm:$0xff] %v610
        %643 = vst [vmem:[#allocation2 + $0x10] sm:$0xff] %v611
        %644 = vst [vmem:[#allocation2 + $0x18] sm:$0xff] %v612
        %645 = vst [vmem:[#allocation2 + $0x20] sm:$0xff] %v613
        %646 = vst [vmem:[#allocation2 + $0x28] sm:$0xff] %v614
        %647 = vst [vmem:[#allocation2 + $0x30] sm:$0xff] %v615
        %648 = vst [vmem:[#allocation2 + $0x38] sm:$0xff] %v616
        %649 = vst [vmem:[#allocation2 + $0x40] sm:$0xff] %v617
        %650 = vst [vmem:[#allocation2 + $0x48] sm:$0xff] %v618
        %651 = vst [vmem:[#allocation2 + $0x50] sm:$0xff] %v619
        %652 = vst [vmem:[#allocation2 + $0x58] sm:$0xff] %v620
        %653 = vst [vmem:[#allocation2 + $0x60] sm:$0xff] %v621
        %654 = vst [vmem:[#allocation2 + $0x68] sm:$0xff] %v622
        %655 = vst [vmem:[#allocation2 + $0x70] sm:$0xff] %v623
        %656 = vst [vmem:[#allocation2 + $0x78] sm:$0xff] %v624
        %657 = vst [vmem:[#allocation2 + $0x80] sm:$0xff] %v625
        %658 = vst [vmem:[#allocation2 + $0x88] sm:$0xff] %v626
        %659 = vst [vmem:[#allocation2 + $0x90] sm:$0xff] %v627
        %660 = vst [vmem:[#allocation2 + $0x98] sm:$0xff] %v628
        %661 = vst [vmem:[#allocation2 + $0xa0] sm:$0xff] %v629
        %662 = vst [vmem:[#allocation2 + $0xa8] sm:$0xff] %v630
        %663 = vst [vmem:[#allocation2 + $0xb0] sm:$0xff] %v631
        %664 = vst [vmem:[#allocation2 + $0xb8] sm:$0xff] %v632
        %665 = vst [vmem:[#allocation2 + $0xc0] sm:$0xff] %v633
        %666 = vst [vmem:[#allocation2 + $0xc8] sm:$0xff] %v634
        %667 = vst [vmem:[#allocation2 + $0xd0] sm:$0xff] %v635
        %668 = vst [vmem:[#allocation2 + $0xd8] sm:$0xff] %v636
        %669 = vst [vmem:[#allocation2 + $0xe0] sm:$0xff] %v637
        %670 = vst [vmem:[#allocation2 + $0xe8] sm:$0xff] %v638
        %671 = vst [vmem:[#allocation2 + $0xf0] sm:$0xff] %v639
        %672 = vst [vmem:[#allocation2 + $0xf8] sm:$0xff] %v640
        // Predicated region
        $region45: #{tpu_custom_call.1} parent=31 // pred_check
          %p673 = pneg %p255
        $region46: #{tpu_custom_call.1} parent=31 // pred_check_branch
          %675 = sbr.rel (%p673) target = $region48
        $region47: #{tpu_custom_call.1} parent=31 // pred_region
          %v676 = vld [vmem:[#allocation2] sm:$0xff]
          %v677 = vld [vmem:[#allocation2 + $0x8] sm:$0xff]
          %v678 = vld [vmem:[#allocation2 + $0x10] sm:$0xff]
          %v679 = vld [vmem:[#allocation2 + $0x18] sm:$0xff]
          %v680 = vld [vmem:[#allocation2 + $0x20] sm:$0xff]
          %v681 = vld [vmem:[#allocation2 + $0x28] sm:$0xff]
          %v682 = vld [vmem:[#allocation2 + $0x30] sm:$0xff]
          %v683 = vld [vmem:[#allocation2 + $0x38] sm:$0xff]
          %v684 = vld [vmem:[#allocation2 + $0x40] sm:$0xff]
          %v685 = vld [vmem:[#allocation2 + $0x48] sm:$0xff]
          %v686 = vld [vmem:[#allocation2 + $0x50] sm:$0xff]
          %v687 = vld [vmem:[#allocation2 + $0x58] sm:$0xff]
          %v688 = vld [vmem:[#allocation2 + $0x60] sm:$0xff]
          %v689 = vld [vmem:[#allocation2 + $0x68] sm:$0xff]
          %v690 = vld [vmem:[#allocation2 + $0x70] sm:$0xff]
          %v691 = vld [vmem:[#allocation2 + $0x78] sm:$0xff]
          %v692 = vld [vmem:[#allocation2 + $0x80] sm:$0xff]
          %v693 = vld [vmem:[#allocation2 + $0x88] sm:$0xff]
          %v694 = vld [vmem:[#allocation2 + $0x90] sm:$0xff]
          %v695 = vld [vmem:[#allocation2 + $0x98] sm:$0xff]
          %v696 = vld [vmem:[#allocation2 + $0xa0] sm:$0xff]
          %v697 = vld [vmem:[#allocation2 + $0xa8] sm:$0xff]
          %v698 = vld [vmem:[#allocation2 + $0xb0] sm:$0xff]
          %v699 = vld [vmem:[#allocation2 + $0xb8] sm:$0xff]
          %v700 = vld [vmem:[#allocation2 + $0xc0] sm:$0xff]
          %v701 = vld [vmem:[#allocation2 + $0xc8] sm:$0xff]
          %v702 = vld [vmem:[#allocation2 + $0xd0] sm:$0xff]
          %v703 = vld [vmem:[#allocation2 + $0xd8] sm:$0xff]
          %v704 = vld [vmem:[#allocation2 + $0xe0] sm:$0xff]
          %v705 = vld [vmem:[#allocation2 + $0xe8] sm:$0xff]
          %v706 = vld [vmem:[#allocation2 + $0xf0] sm:$0xff]
          %v707 = vld [vmem:[#allocation2 + $0xf8] sm:$0xff]
          %v708 = vld [vmem:[%s253] sm:$0x1]
          %v710 = vperm.slane %v708, 0
          %v712 = vadd.f32 %v676, %v710
          %v713 = vadd.f32 %v677, %v710
          %v714 = vadd.f32 %v678, %v710
          %v715 = vadd.f32 %v679, %v710
          %v716 = vadd.f32 %v680, %v710
          %v717 = vadd.f32 %v681, %v710
          %v718 = vadd.f32 %v682, %v710
          %v719 = vadd.f32 %v683, %v710
          %v720 = vadd.f32 %v684, %v710
          %v721 = vadd.f32 %v685, %v710
          %v722 = vadd.f32 %v686, %v710
          %v723 = vadd.f32 %v687, %v710
          %v724 = vadd.f32 %v688, %v710
          %v725 = vadd.f32 %v689, %v710
          %v726 = vadd.f32 %v690, %v710
          %v727 = vadd.f32 %v691, %v710
          %v728 = vadd.f32 %v692, %v710
          %v729 = vadd.f32 %v693, %v710
          %v730 = vadd.f32 %v694, %v710
          %v731 = vadd.f32 %v695, %v710
          %v732 = vadd.f32 %v696, %v710
          %v733 = vadd.f32 %v697, %v710
          %v734 = vadd.f32 %v698, %v710
          %v735 = vadd.f32 %v699, %v710
          %v736 = vadd.f32 %v700, %v710
          %v737 = vadd.f32 %v701, %v710
          %v738 = vadd.f32 %v702, %v710
          %v739 = vadd.f32 %v703, %v710
          %v740 = vadd.f32 %v704, %v710
          %v741 = vadd.f32 %v705, %v710
          %v742 = vadd.f32 %v706, %v710
          %v743 = vadd.f32 %v707, %v710
          %v744 = vmax.f32 %v712, 0.0
          %v745 = vmax.f32 %v713, 0.0
          %v746 = vmax.f32 %v714, 0.0
          %v747 = vmax.f32 %v715, 0.0
          %v748 = vmax.f32 %v716, 0.0
          %v749 = vmax.f32 %v717, 0.0
          %v750 = vmax.f32 %v718, 0.0
          %v751 = vmax.f32 %v719, 0.0
          %v752 = vmax.f32 %v720, 0.0
          %v753 = vmax.f32 %v721, 0.0
          %v754 = vmax.f32 %v722, 0.0
          %v755 = vmax.f32 %v723, 0.0
          %v756 = vmax.f32 %v724, 0.0
          %v757 = vmax.f32 %v725, 0.0
          %v758 = vmax.f32 %v726, 0.0
          %v759 = vmax.f32 %v727, 0.0
          %v760 = vmax.f32 %v728, 0.0
          %v761 = vmax.f32 %v729, 0.0
          %v762 = vmax.f32 %v730, 0.0
          %v763 = vmax.f32 %v731, 0.0
          %v764 = vmax.f32 %v732, 0.0
          %v765 = vmax.f32 %v733, 0.0
          %v766 = vmax.f32 %v734, 0.0
          %v767 = vmax.f32 %v735, 0.0
          %v768 = vmax.f32 %v736, 0.0
          %v769 = vmax.f32 %v737, 0.0
          %v770 = vmax.f32 %v738, 0.0
          %v771 = vmax.f32 %v739, 0.0
          %v772 = vmax.f32 %v740, 0.0
          %v773 = vmax.f32 %v741, 0.0
          %v774 = vmax.f32 %v742, 0.0
          %v775 = vmax.f32 %v743, 0.0
          %776 = vst [vmem:[%s249] sm:$0xff] %v744
          %777 = vst [vmem:[%s249 + $0x8] sm:$0xff] %v745
          %778 = vst [vmem:[%s249 + $0x10] sm:$0xff] %v746
          %779 = vst [vmem:[%s249 + $0x18] sm:$0xff] %v747
          %780 = vst [vmem:[%s249 + $0x20] sm:$0xff] %v748
          %781 = vst [vmem:[%s249 + $0x28] sm:$0xff] %v749
          %782 = vst [vmem:[%s249 + $0x30] sm:$0xff] %v750
          %783 = vst [vmem:[%s249 + $0x38] sm:$0xff] %v751
          %784 = vst [vmem:[%s249 + $0x40] sm:$0xff] %v752
          %785 = vst [vmem:[%s249 + $0x48] sm:$0xff] %v753
          %786 = vst [vmem:[%s249 + $0x50] sm:$0xff] %v754
          %787 = vst [vmem:[%s249 + $0x58] sm:$0xff] %v755
          %788 = vst [vmem:[%s249 + $0x60] sm:$0xff] %v756
          %789 = vst [vmem:[%s249 + $0x68] sm:$0xff] %v757
          %790 = vst [vmem:[%s249 + $0x70] sm:$0xff] %v758
          %791 = vst [vmem:[%s249 + $0x78] sm:$0xff] %v759
          %792 = vst [vmem:[%s249 + $0x80] sm:$0xff] %v760
          %793 = vst [vmem:[%s249 + $0x88] sm:$0xff] %v761
          %794 = vst [vmem:[%s249 + $0x90] sm:$0xff] %v762
          %795 = vst [vmem:[%s249 + $0x98] sm:$0xff] %v763
          %796 = vst [vmem:[%s249 + $0xa0] sm:$0xff] %v764
          %797 = vst [vmem:[%s249 + $0xa8] sm:$0xff] %v765
          %798 = vst [vmem:[%s249 + $0xb0] sm:$0xff] %v766
          %799 = vst [vmem:[%s249 + $0xb8] sm:$0xff] %v767
          %800 = vst [vmem:[%s249 + $0xc0] sm:$0xff] %v768
          %801 = vst [vmem:[%s249 + $0xc8] sm:$0xff] %v769
          %802 = vst [vmem:[%s249 + $0xd0] sm:$0xff] %v770
          %803 = vst [vmem:[%s249 + $0xd8] sm:$0xff] %v771
          %804 = vst [vmem:[%s249 + $0xe0] sm:$0xff] %v772
          %805 = vst [vmem:[%s249 + $0xe8] sm:$0xff] %v773
          %806 = vst [vmem:[%s249 + $0xf0] sm:$0xff] %v774
          %807 = vst [vmem:[%s249 + $0xf8] sm:$0xff] %v775
        $region48: #{tpu_custom_call.1} parent=31 // pred_fallthru
          _
        %s808 = sand.u32 %s130, 1
        %s809 = scalar_lea.sflag [#allocation5], %s808
        %s810 = sand.u32 %s130, 1
        %s811 = smul.addr %s810, 256
        %s812 = scalar_lea.vmem [#allocation8], %s811
        // Predicated region
        $region49: #{tpu_custom_call.1} parent=31 // pred_check
          %p813 = pneg %p140
        $region50: #{tpu_custom_call.1} parent=31 // pred_check_branch
          %815 = sbr.rel (%p813) target = $region52
        $region51: #{tpu_custom_call.1} parent=31 // pred_region
          %s816 = smul.u32 32, %s26
          %818 = vsyncadd %s809, 0
          %s819 = sadd.s32 %s27, %s816
          %s820 = smul.addr %s819, 8
          %s821 = scalar_lea.hbm %s3, %s820
          %s822 = sshll.u32 %s812, 4
          %s823 = int_to_ptr.vmem [resolvable:$true] %s822
          %s824 = sshll.u32 %s821, 4
          %s825 = int_to_ptr.hbm [resolvable:$true] %s824
          %830 = dma.vmem_to_hbm [thread:$0]  %s823, 4096, %s825, %s809, 128, 128, 8
        $region52: #{tpu_custom_call.1} parent=31 // pred_fallthru
          _
      $region32: #{tpu_custom_call.1} parent=5 // pred_fallthru
        _
      %p831 = scmp.le.s32.totalorder 2, %s16
      // Predicated region
      $region53: #{tpu_custom_call.1} parent=5 // pred_check
        %p832 = pneg %p831
      $region54: #{tpu_custom_call.1} parent=5 // pred_check_branch
        %834 = sbr.rel (%p832) target = $region56
      $region55: #{tpu_custom_call.1} parent=5 // pred_region
        %s835 = ssub.s32 %s16, 2
        // Predicated region
        $region57: #{tpu_custom_call.1} parent=55 // pred_check
          %p836 = pneg %p146
        $region58: #{tpu_custom_call.1} parent=55 // pred_check_branch
          %838 = sbr.rel (%p836) target = $region60
        $region59: #{tpu_custom_call.1} parent=55 // pred_region
          %s839 = sand.u32 %s131, 1
          %s840 = scalar_lea.sflag [#allocation5], %s839
          %s841 = sand.u32 %s131, 1
          %s842 = smul.addr %s841, 256
          %s843 = scalar_lea.vmem [#allocation8], %s842
          %845 = dma.done %s840, 4096
        $region60: #{tpu_custom_call.1} parent=55 // pred_fallthru
          _
      $region56: #{tpu_custom_call.1} parent=5 // pred_fallthru
        _
    $region6: #{tpu_custom_call.1} parent=1 // loop_footer
      %s20 = sadd.s32 1, %s16
    $region7: #{tpu_custom_call.1} parent=1 // loop_footer_branch
      %15 = sbr.rel target = $region3
    $region8: #{tpu_custom_call.1} parent=1 // loop_exit
      _
    %846 = vsyncpa [#allocation4], 1
    %s847 = scalar_lea.sflag [#allocation4], 1
    %848 = vsyncpa %s847, 1
    %849 = vsyncpa [#allocation7], 1
    %850 = vsyncpa [#allocation5], 1
    %s851 = scalar_lea.sflag [#allocation5], 1
    %852 = vsyncpa %s851, 1

</llo_original>
